<compile_context>
chip_gen: v5e
topology: v5e:2x2
jax: 0.10.0
libtpu: 0.0.40
codegen_flags: <defaults>
</compile_context>

<pallas_src>
import functools

import jax
import jax.numpy as jnp
from jax.experimental import pallas as pl
from jax.experimental.pallas import tpu as pltpu


def _sdpa_kernel(q_ref, k_ref, v_ref, o_ref, a_ref, *, inv_temperature, lk_real):
    # q_ref: (G, TQ, D); k_ref/v_ref: (G, Lk_pad, D) VMEM tiles, native dtype.
    q = q_ref[...] * inv_temperature      # matches torch op order (q / T) in native dtype
    k = k_ref[...]
    v = v_ref[...]

    # Attention logits (G, TQ, Lk): contract the last dims directly (no k
    # transpose / XLU relayout); the MXU accumulates in f32 regardless of the
    # operand dtype.
    s = jnp.einsum("gqd,gkd->gqk", q, k, preferred_element_type=jnp.float32)

    if lk_real != s.shape[-1]:
        # Wrapper padded Lk to a lane multiple; mask the pad columns to -inf so
        # they contribute exactly zero probability.
        col = jax.lax.broadcasted_iota(jnp.int32, s.shape, dimension=2)
        s = jnp.where(col < lk_real, s, -jnp.inf)

    # Numerically stable softmax over Lk, in f32.
    m = jnp.max(s, axis=-1, keepdims=True)
    e = jnp.exp(s - m)
    denom = jnp.sum(e, axis=-1, keepdims=True)
    p = e * pl.reciprocal(denom, approx=True)   # EUP slot, idle next to the exp

    # Narrow p exactly once; reuse for the PV matmul (keeps the MXU at bf16
    # peak for bf16 inputs) and, when dtypes match, for the attention store.
    p_nar = p.astype(v_ref.dtype)
    out = jnp.einsum("gqk,gkd->gqd", p_nar, v, preferred_element_type=jnp.float32)

    if a_ref.dtype == v_ref.dtype:
        a_ref[...] = p_nar
    elif a_ref.dtype == jnp.float32:
        a_ref[...] = p
    else:
        a_ref[...] = p.astype(a_ref.dtype)
    o_ref[...] = out.astype(o_ref.dtype)


def _vmem_capacity_bytes():
    try:
        return int(pltpu.get_tpu_info().vmem_capacity_bytes)
    except Exception:
        return 64 * 1024 * 1024   # unknown -> assume v7x-sized VMEM (conservative)


def _choose_tiling(bh, lq, lk, d, in_isz, attn_isz, budget_bytes):
    """Pick (heads-per-step G, query-rows-per-step TQ) under a VMEM budget.

    Accounts for the pipelined I/O tiles *and* the f32 softmax intermediates
    (s, e, p), which dominate at large Lk.
    """
    if lq % 128 == 0:
        tq_candidates = [t for t in (512, 256, 128) if lq % t == 0]
    else:
        tq_candidates = [lq]   # full extent (BlockSpec-legal: equals array dim)

    def per_step_bytes(g, tq):
        io = (2 * tq * d * in_isz            # q    (double-buffered)
              + 2 * 2 * lk * d * in_isz      # k, v (budgeted double-buffered;
                                             #       Buffered(1) only adds headroom)
              + 2 * tq * d * in_isz          # o    (double-buffered)
              + 2 * tq * lk * attn_isz)      # attn (double-buffered)
        inter = tq * lk * (3 * 4 + in_isz)   # s, e, p in f32 + narrowed p
        return g * (io + inter)

    # Prefer growing TQ (longer MXU passes, wider lane-dense stores) ...
    tq = None
    for cand in tq_candidates:
        if per_step_bytes(1, cand) <= budget_bytes:
            tq = cand
            break
    if tq is None:
        # TODO(synk): tile Lk inside the kernel (online softmax + a second
        # normalize-and-store pass) for very long contexts on small-VMEM parts.
        raise ValueError(
            "ScaledDotProductAttention: a single head tile (TQ="
            f"{tq_candidates[-1]}, Lk={lk}, D={d}) exceeds the VMEM budget of "
            f"{budget_bytes} bytes; in-kernel Lk tiling is not implemented.")

    # ... then batch a few heads per step to amortize the ~0.35 us per-step
    # overhead.  Capped at 4: G does not improve MXU occupancy.
    g = 1
    for cand in (2, 4):
        if bh % cand == 0 and per_step_bytes(cand, tq) <= budget_bytes:
            g = cand
    return g, tq


def scaled_dot_product_attention(q, k, v, temperature, attn_dtype=None):
    """q: [B, H, Lq, D], k/v: [B, H, Lk, D].

    Returns (output [B, H, Lq, D], attn [B, H, Lq, Lk]) — the eval-mode forward
    of the PyTorch module (dropout is identity in eval).

    attn_dtype: optional narrower dtype (e.g. jnp.bfloat16) for the attention
    probabilities to halve their HBM writeback (the dominant byte stream);
    defaults to q.dtype to match the module.
    """
    B, H, Lq, D = q.shape
    Lk = k.shape[2]
    BH = B * H
    if attn_dtype is None:
        attn_dtype = q.dtype
    attn_dtype = jnp.dtype(attn_dtype)

    qf = q.reshape(BH, Lq, D)
    kf = k.reshape(BH, Lk, D)
    vf = v.reshape(BH, Lk, D)

    # Keep the dominant store (dense attention matrix) lane-dense: pad Lk to a
    # 128 multiple when it is large enough for the pad to be cheap.  Padded
    # logits are masked to -inf in-kernel; pad columns are sliced off below.
    Lk_pad = Lk
    if Lk >= 128 and Lk % 128 != 0:
        Lk_pad = ((Lk + 127) // 128) * 128
        pad = [(0, 0), (0, Lk_pad - Lk), (0, 0)]
        kf = jnp.pad(kf, pad)
        vf = jnp.pad(vf, pad)

    in_isz = jnp.dtype(q.dtype).itemsize
    attn_isz = attn_dtype.itemsize

    # Generation-aware VMEM budgeting: v5e/v6e have 128 MiB VMEM, v7x has
    # 64 MiB per TensorCore.
    vmem_cap = _vmem_capacity_bytes()
    if vmem_cap >= 96 * 1024 * 1024:          # v5e / v6e
        budget_bytes = 44 * 1024 * 1024
        vmem_limit_bytes = 64 * 1024 * 1024
    else:                                      # v7x (or unknown)
        budget_bytes = 18 * 1024 * 1024
        vmem_limit_bytes = 32 * 1024 * 1024

    G, TQ = _choose_tiling(BH, Lq, Lk_pad, D, in_isz, attn_isz, budget_bytes)

    kernel = functools.partial(
        _sdpa_kernel,
        inv_temperature=1.0 / float(temperature),
        lk_real=Lk,
    )

    def build(kv_pipeline_mode):
        kv_kwargs = {}
        if kv_pipeline_mode is not None:
            kv_kwargs["pipeline_mode"] = kv_pipeline_mode
        return pl.pallas_call(
            kernel,
            out_shape=(
                jax.ShapeDtypeStruct((BH, Lq, D), q.dtype),
                jax.ShapeDtypeStruct((BH, Lq, Lk_pad), attn_dtype),
            ),
            grid_spec=pltpu.PrefetchScalarGridSpec(
                num_scalar_prefetch=0,
                grid=(BH // G, Lq // TQ),
                in_specs=[
                    pl.BlockSpec((G, TQ, D), lambda b, qi: (b, qi, 0)),
                    # K/V block index is constant across qi -> the resident
                    # tile is reused instead of re-DMA'd per q tile; single
                    # buffering (when supported) halves its VMEM with no
                    # overlap lost.
                    pl.BlockSpec((G, Lk_pad, D), lambda b, qi: (b, 0, 0),
                                 **kv_kwargs),
                    pl.BlockSpec((G, Lk_pad, D), lambda b, qi: (b, 0, 0),
                                 **kv_kwargs),
                ],
                out_specs=[
                    pl.BlockSpec((G, TQ, D), lambda b, qi: (b, qi, 0)),
                    pl.BlockSpec((G, TQ, Lk_pad), lambda b, qi: (b, qi, 0)),
                ],
            ),
            compiler_params=pltpu.CompilerParams(
                # v7x megacore shards only the head axis so each TensorCore
                # DMAs a disjoint set of K/V tiles (sharding qi would double
                # K/V HBM traffic on an HBM-bound kernel).  No effect on
                # v5e/v6e (1 TC).
                dimension_semantics=("parallel", "arbitrary"),
                vmem_limit_bytes=vmem_limit_bytes,
            ),
        )

    try:
        out_f, attn_f = build(pl.Buffered(1))(qf, kf, vf)
    except Exception:
        # Single-buffered pipeline_mode not supported by this jax/libtpu build;
        # fall back to default double-buffered K/V (the budget already assumes
        # two buffers, so this still fits).
        out_f, attn_f = build(None)(qf, kf, vf)

    if Lk_pad != Lk:
        attn_f = attn_f[:, :, :Lk]

    return out_f.reshape(B, H, Lq, D), attn_f.reshape(B, H, Lq, Lk)


def _reference(q, k, v, temperature):
    s = jnp.einsum("bhqd,bhkd->bhqk", q / temperature, k)
    p = jax.nn.softmax(s, axis=-1)
    o = jnp.einsum("bhqk,bhkd->bhqd", p, v)
    return o, p


if __name__ == "__main__":
    key = jax.random.PRNGKey(0)
    keys = jax.random.split(key, 9)

    # --- small f32 case (module-sized shapes) ---
    B, H, L, D = 2, 2, 8, 32
    temperature = float(D) ** 0.5
    q = jax.random.normal(keys[0], (B, H, L, D), dtype=jnp.float32)
    k = jax.random.normal(keys[1], (B, H, L, D), dtype=jnp.float32)
    v = jax.random.normal(keys[2], (B, H, L, D), dtype=jnp.float32)

    out, attn = scaled_dot_product_attention(q, k, v, temperature)
    out, attn = jax.block_until_ready((out, attn))

    ref_out, ref_attn = _reference(q, k, v, temperature)
    # approx reciprocal in the softmax -> compare at 2e-3.
    assert jnp.allclose(out, ref_out, atol=2e-3, rtol=2e-3), "output mismatch (f32)"
    assert jnp.allclose(attn, ref_attn, atol=2e-3, rtol=2e-3), "attn mismatch (f32)"

    # --- bf16 case exercising the q-tiling path (Lq > 512, lane-dense Lk) ---
    B2, H2, L2, D2 = 1, 2, 1024, 128
    temperature2 = float(D2) ** 0.5
    q2 = jax.random.normal(keys[3], (B2, H2, L2, D2), dtype=jnp.bfloat16)
    k2 = jax.random.normal(keys[4], (B2, H2, L2, D2), dtype=jnp.bfloat16)
    v2 = jax.random.normal(keys[5], (B2, H2, L2, D2), dtype=jnp.bfloat16)

    out2, attn2 = scaled_dot_product_attention(q2, k2, v2, temperature2)
    out2, attn2 = jax.block_until_ready((out2, attn2))

    ref_out2, ref_attn2 = _reference(q2.astype(jnp.float32),
                                     k2.astype(jnp.float32),
                                     v2.astype(jnp.float32), temperature2)
    assert jnp.allclose(out2.astype(jnp.float32), ref_out2, atol=2e-2, rtol=2e-2), \
        "output mismatch (bf16 tiled)"
    assert jnp.allclose(attn2.astype(jnp.float32), ref_attn2, atol=2e-2, rtol=2e-2), \
        "attn mismatch (bf16 tiled)"

    # --- f32 case exercising the Lk padding + masking path (Lk=160 -> 256) ---
    B3, H3, Lq3, Lk3, D3 = 1, 2, 128, 160, 64
    temperature3 = float(D3) ** 0.5
    q3 = jax.random.normal(keys[6], (B3, H3, Lq3, D3), dtype=jnp.float32)
    k3 = jax.random.normal(keys[7], (B3, H3, Lk3, D3), dtype=jnp.float32)
    v3 = jax.random.normal(keys[8], (B3, H3, Lk3, D3), dtype=jnp.float32)

    out3, attn3 = scaled_dot_product_attention(q3, k3, v3, temperature3)
    out3, attn3 = jax.block_until_ready((out3, attn3))

    ref_out3, ref_attn3 = _reference(q3, k3, v3, temperature3)
    assert out3.shape == (B3, H3, Lq3, D3) and attn3.shape == (B3, H3, Lq3, Lk3)
    assert jnp.allclose(out3, ref_out3, atol=2e-3, rtol=2e-3), "output mismatch (padded Lk)"
    assert jnp.allclose(attn3, ref_attn3, atol=2e-3, rtol=2e-3), "attn mismatch (padded Lk)"

    print("KERNEL_OK")
</pallas_src>

<mosaic_0001>
module attributes {stable_mosaic.version = 11 : i64} {
  func.func @_sdpa_kernel(%arg0: i32, %arg1: i32, %arg2: memref<4x8x32xf32, #tpu.memory_space<vmem>>, %arg3: memref<4x8x32xf32, #tpu.memory_space<vmem>>, %arg4: memref<4x8x32xf32, #tpu.memory_space<vmem>>, %arg5: memref<4x8x32xf32, #tpu.memory_space<vmem>>, %arg6: memref<4x8x8xf32, #tpu.memory_space<vmem>>) attributes {dimension_semantics = [#tpu.dimension_semantics<parallel>, #tpu.dimension_semantics<arbitrary>], iteration_bounds = array<i64: 1, 1>, scalar_prefetch = 0 : i64, scratch_operands = 0 : i64, tpu.core_type = #tpu.core_type<tc>, window_params = [{transform_indices = @transform_0, window_bounds = array<i64: 4, 8, 32>}, {pipeline_mode = #tpu.pipeline_mode<synchronous>, transform_indices = @transform_1, window_bounds = array<i64: 4, 8, 32>}, {pipeline_mode = #tpu.pipeline_mode<synchronous>, transform_indices = @transform_2, window_bounds = array<i64: 4, 8, 32>}, {transform_indices = @transform_3, window_bounds = array<i64: 4, 8, 32>}, {transform_indices = @transform_4, window_bounds = array<i64: 4, 8, 8>}]} {
    %c0 = arith.constant 0 : index
    %c0_0 = arith.constant 0 : index
    %c0_1 = arith.constant 0 : index
    %0 = vector.load %arg2[%c0, %c0_0, %c0_1] : memref<4x8x32xf32, #tpu.memory_space<vmem>>, vector<4x8x32xf32>
    %cst = arith.constant 0.176776692 : f32
    %1 = vector.broadcast %cst : f32 to vector<4x8x32xf32>
    %2 = arith.mulf %0, %1 : vector<4x8x32xf32>
    %c0_2 = arith.constant 0 : index
    %c0_3 = arith.constant 0 : index
    %c0_4 = arith.constant 0 : index
    %3 = vector.load %arg3[%c0_2, %c0_3, %c0_4] : memref<4x8x32xf32, #tpu.memory_space<vmem>>, vector<4x8x32xf32>
    %c0_5 = arith.constant 0 : index
    %c0_6 = arith.constant 0 : index
    %c0_7 = arith.constant 0 : index
    %4 = vector.load %arg4[%c0_5, %c0_6, %c0_7] : memref<4x8x32xf32, #tpu.memory_space<vmem>>, vector<4x8x32xf32>
    "tpu.trace_start"() <{level = 10 : i32, message = "gqd,gkd->gqk"}> : () -> ()
    %cst_8 = arith.constant dense<0.000000e+00> : vector<4x8x8xf32>
    %5 = tpu.matmul %2, %3, %cst_8 {dimension_numbers = #tpu.dot_dimension_numbers<[2], [2], [1], [1], [0, 0, 0, 1, 1, 1], [0], [0]>} : vector<4x8x32xf32>, vector<4x8x32xf32>, vector<4x8x8xf32> -> vector<4x8x8xf32>
    "tpu.trace_stop"() : () -> ()
    %cst_9 = arith.constant dense<0xFF800000> : vector<4x8xf32>
    %6 = vector.multi_reduction <maximumf>, %5, %cst_9 [2] : vector<4x8x8xf32> to vector<4x8xf32>
    %7 = vector.shape_cast %6 : vector<4x8xf32> to vector<4x8x1xf32>
    %8 = vector.broadcast %7 : vector<4x8x1xf32> to vector<4x8x8xf32>
    %9 = arith.subf %5, %8 : vector<4x8x8xf32>
    %10 = math.exp %9 : vector<4x8x8xf32>
    %cst_10 = arith.constant dense<0.000000e+00> : vector<4x8xf32>
    %11 = vector.multi_reduction <add>, %10, %cst_10 [2] : vector<4x8x8xf32> to vector<4x8xf32>
    %12 = vector.shape_cast %11 : vector<4x8xf32> to vector<4x8x1xf32>
    %13 = tpu.reciprocal %12 {approx = true} : vector<4x8x1xf32> -> vector<4x8x1xf32>
    %14 = vector.broadcast %13 : vector<4x8x1xf32> to vector<4x8x8xf32>
    %15 = arith.mulf %10, %14 : vector<4x8x8xf32>
    "tpu.trace_start"() <{level = 10 : i32, message = "gqk,gkd->gqd"}> : () -> ()
    %cst_11 = arith.constant dense<0.000000e+00> : vector<4x8x32xf32>
    %16 = tpu.matmul %15, %4, %cst_11 {dimension_numbers = #tpu.dot_dimension_numbers<[2], [1], [1], [2], [0, 0, 0, 1, 1, 2], [0], [0]>} : vector<4x8x8xf32>, vector<4x8x32xf32>, vector<4x8x32xf32> -> vector<4x8x32xf32>
    "tpu.trace_stop"() : () -> ()
    %c0_12 = arith.constant 0 : index
    %c0_13 = arith.constant 0 : index
    %c0_14 = arith.constant 0 : index
    %17 = vector.load %arg6[%c0_12, %c0_13, %c0_14] : memref<4x8x8xf32, #tpu.memory_space<vmem>>, vector<4x8x8xf32>
    tpu.vector_store %arg6[%c0_12, %c0_13, %c0_14], %15 {strides = array<i32>} : memref<4x8x8xf32, #tpu.memory_space<vmem>>, vector<4x8x8xf32>,
    %c0_15 = arith.constant 0 : index
    %c0_16 = arith.constant 0 : index
    %c0_17 = arith.constant 0 : index
    %18 = vector.load %arg5[%c0_15, %c0_16, %c0_17] : memref<4x8x32xf32, #tpu.memory_space<vmem>>, vector<4x8x32xf32>
    tpu.vector_store %arg5[%c0_15, %c0_16, %c0_17], %16 {strides = array<i32>} : memref<4x8x32xf32, #tpu.memory_space<vmem>>, vector<4x8x32xf32>,
    return
  }
  func.func @transform_0(%arg0: i32, %arg1: i32) -> (i32, i32, i32) {
    %c0_i32 = arith.constant 0 : i32
    %c0_i32_0 = arith.constant 0 : i32
    return %arg0, %arg1, %c0_i32 : i32, i32, i32
  }
  func.func @transform_1(%arg0: i32, %arg1: i32) -> (i32, i32, i32) {
    %c0_i32 = arith.constant 0 : i32
    %c0_i32_0 = arith.constant 0 : i32
    %c0_i32_1 = arith.constant 0 : i32
    return %arg0, %c0_i32, %c0_i32_0 : i32, i32, i32
  }
  func.func @transform_2(%arg0: i32, %arg1: i32) -> (i32, i32, i32) {
    %c0_i32 = arith.constant 0 : i32
    %c0_i32_0 = arith.constant 0 : i32
    %c0_i32_1 = arith.constant 0 : i32
    return %arg0, %c0_i32, %c0_i32_0 : i32, i32, i32
  }
  func.func @transform_3(%arg0: i32, %arg1: i32) -> (i32, i32, i32) {
    %c0_i32 = arith.constant 0 : i32
    %c0_i32_0 = arith.constant 0 : i32
    return %arg0, %arg1, %c0_i32 : i32, i32, i32
  }
  func.func @transform_4(%arg0: i32, %arg1: i32) -> (i32, i32, i32) {
    %c0_i32 = arith.constant 0 : i32
    %c0_i32_0 = arith.constant 0 : i32
    return %arg0, %arg1, %c0_i32 : i32, i32, i32
  }
}

module attributes {stable_mosaic.version = 11 : i64} {
  func.func @_sdpa_kernel(%arg0: i32, %arg1: i32, %arg2: memref<4x8x32xf32, #tpu.memory_space<vmem>>, %arg3: memref<4x8x32xf32, #tpu.memory_space<vmem>>, %arg4: memref<4x8x32xf32, #tpu.memory_space<vmem>>, %arg5: memref<4x8x32xf32, #tpu.memory_space<vmem>>, %arg6: memref<4x8x8xf32, #tpu.memory_space<vmem>>) attributes {dimension_semantics = [#tpu.dimension_semantics<parallel>, #tpu.dimension_semantics<arbitrary>], iteration_bounds = array<i64: 1, 1>, scalar_prefetch = 0 : i64, scratch_operands = 0 : i64, tpu.core_type = #tpu.core_type<tc>, window_params = [{transform_indices = @transform_0, window_bounds = array<i64: 4, 8, 32>}, {transform_indices = @transform_1, window_bounds = array<i64: 4, 8, 32>}, {transform_indices = @transform_2, window_bounds = array<i64: 4, 8, 32>}, {transform_indices = @transform_3, window_bounds = array<i64: 4, 8, 32>}, {transform_indices = @transform_4, window_bounds = array<i64: 4, 8, 8>}]} {
    %c0 = arith.constant 0 : index
    %c0_0 = arith.constant 0 : index
    %c0_1 = arith.constant 0 : index
    %0 = vector.load %arg2[%c0, %c0_0, %c0_1] : memref<4x8x32xf32, #tpu.memory_space<vmem>>, vector<4x8x32xf32>
    %cst = arith.constant 0.176776692 : f32
    %1 = vector.broadcast %cst : f32 to vector<4x8x32xf32>
    %2 = arith.mulf %0, %1 : vector<4x8x32xf32>
    %c0_2 = arith.constant 0 : index
    %c0_3 = arith.constant 0 : index
    %c0_4 = arith.constant 0 : index
    %3 = vector.load %arg3[%c0_2, %c0_3, %c0_4] : memref<4x8x32xf32, #tpu.memory_space<vmem>>, vector<4x8x32xf32>
    %c0_5 = arith.constant 0 : index
    %c0_6 = arith.constant 0 : index
    %c0_7 = arith.constant 0 : index
    %4 = vector.load %arg4[%c0_5, %c0_6, %c0_7] : memref<4x8x32xf32, #tpu.memory_space<vmem>>, vector<4x8x32xf32>
    "tpu.trace_start"() <{level = 10 : i32, message = "gqd,gkd->gqk"}> : () -> ()
    %cst_8 = arith.constant dense<0.000000e+00> : vector<4x8x8xf32>
    %5 = tpu.matmul %2, %3, %cst_8 {dimension_numbers = #tpu.dot_dimension_numbers<[2], [2], [1], [1], [0, 0, 0, 1, 1, 1], [0], [0]>} : vector<4x8x32xf32>, vector<4x8x32xf32>, vector<4x8x8xf32> -> vector<4x8x8xf32>
    "tpu.trace_stop"() : () -> ()
    %cst_9 = arith.constant dense<0xFF800000> : vector<4x8xf32>
    %6 = vector.multi_reduction <maximumf>, %5, %cst_9 [2] : vector<4x8x8xf32> to vector<4x8xf32>
    %7 = vector.shape_cast %6 : vector<4x8xf32> to vector<4x8x1xf32>
    %8 = vector.broadcast %7 : vector<4x8x1xf32> to vector<4x8x8xf32>
    %9 = arith.subf %5, %8 : vector<4x8x8xf32>
    %10 = math.exp %9 : vector<4x8x8xf32>
    %cst_10 = arith.constant dense<0.000000e+00> : vector<4x8xf32>
    %11 = vector.multi_reduction <add>, %10, %cst_10 [2] : vector<4x8x8xf32> to vector<4x8xf32>
    %12 = vector.shape_cast %11 : vector<4x8xf32> to vector<4x8x1xf32>
    %13 = tpu.reciprocal %12 {approx = true} : vector<4x8x1xf32> -> vector<4x8x1xf32>
    %14 = vector.broadcast %13 : vector<4x8x1xf32> to vector<4x8x8xf32>
    %15 = arith.mulf %10, %14 : vector<4x8x8xf32>
    "tpu.trace_start"() <{level = 10 : i32, message = "gqk,gkd->gqd"}> : () -> ()
    %cst_11 = arith.constant dense<0.000000e+00> : vector<4x8x32xf32>
    %16 = tpu.matmul %15, %4, %cst_11 {dimension_numbers = #tpu.dot_dimension_numbers<[2], [1], [1], [2], [0, 0, 0, 1, 1, 2], [0], [0]>} : vector<4x8x8xf32>, vector<4x8x32xf32>, vector<4x8x32xf32> -> vector<4x8x32xf32>
    "tpu.trace_stop"() : () -> ()
    %c0_12 = arith.constant 0 : index
    %c0_13 = arith.constant 0 : index
    %c0_14 = arith.constant 0 : index
    %17 = vector.load %arg6[%c0_12, %c0_13, %c0_14] : memref<4x8x8xf32, #tpu.memory_space<vmem>>, vector<4x8x8xf32>
    tpu.vector_store %arg6[%c0_12, %c0_13, %c0_14], %15 {strides = array<i32>} : memref<4x8x8xf32, #tpu.memory_space<vmem>>, vector<4x8x8xf32>,
    %c0_15 = arith.constant 0 : index
    %c0_16 = arith.constant 0 : index
    %c0_17 = arith.constant 0 : index
    %18 = vector.load %arg5[%c0_15, %c0_16, %c0_17] : memref<4x8x32xf32, #tpu.memory_space<vmem>>, vector<4x8x32xf32>
    tpu.vector_store %arg5[%c0_15, %c0_16, %c0_17], %16 {strides = array<i32>} : memref<4x8x32xf32, #tpu.memory_space<vmem>>, vector<4x8x32xf32>,
    return
  }
  func.func @transform_0(%arg0: i32, %arg1: i32) -> (i32, i32, i32) {
    %c0_i32 = arith.constant 0 : i32
    %c0_i32_0 = arith.constant 0 : i32
    return %arg0, %arg1, %c0_i32 : i32, i32, i32
  }
  func.func @transform_1(%arg0: i32, %arg1: i32) -> (i32, i32, i32) {
    %c0_i32 = arith.constant 0 : i32
    %c0_i32_0 = arith.constant 0 : i32
    %c0_i32_1 = arith.constant 0 : i32
    return %arg0, %c0_i32, %c0_i32_0 : i32, i32, i32
  }
  func.func @transform_2(%arg0: i32, %arg1: i32) -> (i32, i32, i32) {
    %c0_i32 = arith.constant 0 : i32
    %c0_i32_0 = arith.constant 0 : i32
    %c0_i32_1 = arith.constant 0 : i32
    return %arg0, %c0_i32, %c0_i32_0 : i32, i32, i32
  }
  func.func @transform_3(%arg0: i32, %arg1: i32) -> (i32, i32, i32) {
    %c0_i32 = arith.constant 0 : i32
    %c0_i32_0 = arith.constant 0 : i32
    return %arg0, %arg1, %c0_i32 : i32, i32, i32
  }
  func.func @transform_4(%arg0: i32, %arg1: i32) -> (i32, i32, i32) {
    %c0_i32 = arith.constant 0 : i32
    %c0_i32_0 = arith.constant 0 : i32
    return %arg0, %arg1, %c0_i32 : i32, i32, i32
  }
}

</mosaic_0001>

<llo_original>
// kernel: tpu_custom_call.1
$region0: #{tpu_custom_call.1}
  #allocation0 [shape = 'u32[]', space=smem, size = 0x4, offset = 0x4, fixed_abs, tag = 'smem constant byte address 0x4 - core index']
  #allocation1 [shape = 'u32[72,128]{1,0:T(1,128)}', space=vmem, size = 0x9000, scoped, tag = 'internal scratch']
  %s0 = inlined_call_operand.hbm [shape: f32[4,8,32], index: 0, kind: input, shape index: {}]
  %s1 = inlined_call_operand.hbm [shape: f32[4,8,32], index: 1, kind: input, shape index: {}]
  %s2 = inlined_call_operand.hbm [shape: f32[4,8,32], index: 2, kind: input, shape index: {}]
  %s3 = inlined_call_operand.hbm [shape: f32[4,8,32], index: 3, kind: output, shape index: {0}]
  %s4 = inlined_call_operand.hbm [shape: f32[4,8,8], index: 4, kind: output, shape index: {1}]
  %5 = xla_tuple %s3, %s4
  %s6 = sld [smem:[#allocation0]]
  $region42: #{tpu_custom_call.1} parent=0
    _
  %s8 = ssub.s32 1, %s6
  %s9 = scalar_select 0, %s8, %s6
  $region1: #{tpu_custom_call.1} parent=0
    #allocation2 [shape = 'u8[16384]{0}', space=vmem, size = 0x4000, scoped, tag = 'input window, operand 0, single buffered']
    #allocation3 [shape = 's32[1]{0}', space=sflag, size = 0x4, scoped, tag = 'scoped memory for tpu_custom_call.1']
    #allocation4 [shape = 's32[1]{0}', space=sflag, size = 0x4, scoped, tag = 'scoped memory for tpu_custom_call.1']
    #allocation5 [shape = 'u8[16384]{0}', space=vmem, size = 0x4000, scoped, tag = 'input window, operand 1, single buffered']
    #allocation6 [shape = 's32[1]{0}', space=sflag, size = 0x4, scoped, tag = 'scoped memory for tpu_custom_call.1']
    #allocation7 [shape = 'u8[16384]{0}', space=vmem, size = 0x4000, scoped, tag = 'input window, operand 2, single buffered']
    #allocation8 [shape = 'u8[16384]{0}', space=vmem, size = 0x4000, scoped, tag = 'output window, operand 0, single buffered']
    #allocation9 [shape = 'u8[16384]{0}', space=vmem, size = 0x4000, scoped, tag = 'output window, operand 1, single buffered']
    #allocation10 [shape = 's32[1]{0}', space=sflag, size = 0x4, scoped, tag = 'scoped memory for tpu_custom_call.1']
    %10 = vsyncpa [#allocation3], 0
    %11 = vsyncpa [#allocation6], 0
    %12 = vsyncpa [#allocation4], 0
    %13 = vsyncpa [#allocation10], 0
    // Predicated region
    $region2: #{tpu_custom_call.1} parent=1 // pred_check
      _
    $region3: #{tpu_custom_call.1} parent=1 // pred_check_branch
      %15 = sbr.rel (0) target = $region5
    $region4: #{tpu_custom_call.1} parent=1 // pred_region
      %17 = vsyncadd [#allocation3], 0
      %s18 = sshll.u32 %s0, 4
      %s19 = int_to_ptr.hbm [resolvable:$true] %s18
      %s20 = sshll.u32 [#allocation2], 4
      %s21 = int_to_ptr.vmem [resolvable:$true] %s20
      %26 = dma.hbm_to_vmem [thread:$0]  %s19, 512, %s21, [#allocation3], 128, 128, 8
    $region5: #{tpu_custom_call.1} parent=1 // pred_fallthru
      _
    // Predicated region
    $region6: #{tpu_custom_call.1} parent=1 // pred_check
      _
    $region7: #{tpu_custom_call.1} parent=1 // pred_check_branch
      %28 = sbr.rel (0) target = $region9
    $region8: #{tpu_custom_call.1} parent=1 // pred_region
      %30 = vsyncadd [#allocation6], 0
      %s31 = sshll.u32 %s1, 4
      %s32 = int_to_ptr.hbm [resolvable:$true] %s31
      %s33 = sshll.u32 [#allocation5], 4
      %s34 = int_to_ptr.vmem [resolvable:$true] %s33
      %39 = dma.hbm_to_vmem [thread:$0]  %s32, 512, %s34, [#allocation6], 128, 128, 8
    $region9: #{tpu_custom_call.1} parent=1 // pred_fallthru
      _
    // Predicated region
    $region10: #{tpu_custom_call.1} parent=1 // pred_check
      _
    $region11: #{tpu_custom_call.1} parent=1 // pred_check_branch
      %41 = sbr.rel (0) target = $region13
    $region12: #{tpu_custom_call.1} parent=1 // pred_region
      %43 = vsyncadd [#allocation6], 0
      %s44 = sshll.u32 %s2, 4
      %s45 = int_to_ptr.hbm [resolvable:$true] %s44
      %s46 = sshll.u32 [#allocation7], 4
      %s47 = int_to_ptr.vmem [resolvable:$true] %s46
      %52 = dma.hbm_to_vmem [thread:$0]  %s45, 512, %s47, [#allocation6], 128, 128, 8
    $region13: #{tpu_custom_call.1} parent=1 // pred_fallthru
      _
    // Predicated region
    $region14: #{tpu_custom_call.1} parent=1 // pred_check
      _
    $region15: #{tpu_custom_call.1} parent=1 // pred_check_branch
      %54 = sbr.rel (0) target = $region17
    $region16: #{tpu_custom_call.1} parent=1 // pred_region
      %56 = dma.done [#allocation3], 512
    $region17: #{tpu_custom_call.1} parent=1 // pred_fallthru
      _
    // Predicated region
    $region18: #{tpu_custom_call.1} parent=1 // pred_check
      _
    $region19: #{tpu_custom_call.1} parent=1 // pred_check_branch
      %58 = sbr.rel (0) target = $region21
    $region20: #{tpu_custom_call.1} parent=1 // pred_region
      %60 = dma.done [#allocation6], 512
    $region21: #{tpu_custom_call.1} parent=1 // pred_fallthru
      _
    // Predicated region
    $region22: #{tpu_custom_call.1} parent=1 // pred_check
      _
    $region23: #{tpu_custom_call.1} parent=1 // pred_check_branch
      %62 = sbr.rel (0) target = $region25
    $region24: #{tpu_custom_call.1} parent=1 // pred_region
      %64 = dma.done [#allocation6], 512
    $region25: #{tpu_custom_call.1} parent=1 // pred_fallthru
      _
    %v65 = vld [vmem:[#allocation2] sm:$0xff]
    %v66 = vld [vmem:[#allocation2 + $0x8] sm:$0xff]
    %v67 = vld [vmem:[#allocation2 + $0x10] sm:$0xff]
    %v68 = vld [vmem:[#allocation2 + $0x18] sm:$0xff]
    %v69 = vmul.f32 %v65, 0.17677669
    %v70 = vmul.f32 %v66, 0.17677669
    %v71 = vmul.f32 %v67, 0.17677669
    %v72 = vmul.f32 %v68, 0.17677669
    %v73 = vld [vmem:[#allocation5] sm:$0xff]
    %v74 = vld [vmem:[#allocation5 + $0x8] sm:$0xff]
    %v75 = vld [vmem:[#allocation5 + $0x10] sm:$0xff]
    %v76 = vld [vmem:[#allocation5 + $0x18] sm:$0xff]
    %v77 = vld [vmem:[#allocation7] sm:$0xff]
    %v78 = vld [vmem:[#allocation7 + $0x8] sm:$0xff]
    %v79 = vld [vmem:[#allocation7 + $0x10] sm:$0xff]
    %v80 = vld [vmem:[#allocation7 + $0x18] sm:$0xff]
    %vm81 = vcmask 261120
    %v83 = vsel %vm81, %v69, 0
    %v86 = vsel %vm81, %v73, 0
    %88 = vmatpush.xpose.msra.mxu0 0.0
    %89 = vmatpush.xpose.msra.mxu0 0.0
    %90 = vmatpush.xpose.msra.mxu0 0.0
    %91 = vmatpush.xpose.msra.mxu0 0.0
    %92 = vmatpush.xpose.msra.mxu0 0.0
    %93 = vmatpush.xpose.msra.mxu0 0.0
    %94 = vmatpush.xpose.msra.mxu0 0.0
    %95 = vmatpush.xpose.msra.mxu0 0.0
    %96 = vmatpush.xpose.msra.mxu0 0.0
    %97 = vmatpush.xpose.msra.mxu0 0.0
    %98 = vmatpush.xpose.msra.mxu0 0.0
    %99 = vmatpush.xpose.msra.mxu0 0.0
    %100 = vmatpush.xpose.msra.mxu0 0.0
    %101 = vmatpush.xpose.msra.mxu0 0.0
    %102 = vmatpush.xpose.msra.mxu0 0.0
    %103 = vmatpush.xpose.msra.mxu0 %v86
    %104 = vmatmul.f32.gmra.mxu0 %v83
    %v105 = vpop.f32.mrf.mxu0
    %v106 = vadd.f32 0.0, %v105
    %107 = vdwg.mxu0
    %v109 = vsel %vm81, %v70, 0
    %v112 = vsel %vm81, %v74, 0
    %114 = vmatpush.xpose.msra.mxu0 0.0
    %115 = vmatpush.xpose.msra.mxu0 0.0
    %116 = vmatpush.xpose.msra.mxu0 0.0
    %117 = vmatpush.xpose.msra.mxu0 0.0
    %118 = vmatpush.xpose.msra.mxu0 0.0
    %119 = vmatpush.xpose.msra.mxu0 0.0
    %120 = vmatpush.xpose.msra.mxu0 0.0
    %121 = vmatpush.xpose.msra.mxu0 0.0
    %122 = vmatpush.xpose.msra.mxu0 0.0
    %123 = vmatpush.xpose.msra.mxu0 0.0
    %124 = vmatpush.xpose.msra.mxu0 0.0
    %125 = vmatpush.xpose.msra.mxu0 0.0
    %126 = vmatpush.xpose.msra.mxu0 0.0
    %127 = vmatpush.xpose.msra.mxu0 0.0
    %128 = vmatpush.xpose.msra.mxu0 0.0
    %129 = vmatpush.xpose.msra.mxu0 %v112
    %130 = vmatmul.f32.gmra.mxu0 %v109
    %v131 = vpop.f32.mrf.mxu0
    %v132 = vadd.f32 0.0, %v131
    %133 = vdwg.mxu0
    %v135 = vsel %vm81, %v71, 0
    %v138 = vsel %vm81, %v75, 0
    %140 = vmatpush.xpose.msra.mxu0 0.0
    %141 = vmatpush.xpose.msra.mxu0 0.0
    %142 = vmatpush.xpose.msra.mxu0 0.0
    %143 = vmatpush.xpose.msra.mxu0 0.0
    %144 = vmatpush.xpose.msra.mxu0 0.0
    %145 = vmatpush.xpose.msra.mxu0 0.0
    %146 = vmatpush.xpose.msra.mxu0 0.0
    %147 = vmatpush.xpose.msra.mxu0 0.0
    %148 = vmatpush.xpose.msra.mxu0 0.0
    %149 = vmatpush.xpose.msra.mxu0 0.0
    %150 = vmatpush.xpose.msra.mxu0 0.0
    %151 = vmatpush.xpose.msra.mxu0 0.0
    %152 = vmatpush.xpose.msra.mxu0 0.0
    %153 = vmatpush.xpose.msra.mxu0 0.0
    %154 = vmatpush.xpose.msra.mxu0 0.0
    %155 = vmatpush.xpose.msra.mxu0 %v138
    %156 = vmatmul.f32.gmra.mxu0 %v135
    %v157 = vpop.f32.mrf.mxu0
    %v158 = vadd.f32 0.0, %v157
    %159 = vdwg.mxu0
    %v161 = vsel %vm81, %v72, 0
    %v164 = vsel %vm81, %v76, 0
    %166 = vmatpush.xpose.msra.mxu0 0.0
    %167 = vmatpush.xpose.msra.mxu0 0.0
    %168 = vmatpush.xpose.msra.mxu0 0.0
    %169 = vmatpush.xpose.msra.mxu0 0.0
    %170 = vmatpush.xpose.msra.mxu0 0.0
    %171 = vmatpush.xpose.msra.mxu0 0.0
    %172 = vmatpush.xpose.msra.mxu0 0.0
    %173 = vmatpush.xpose.msra.mxu0 0.0
    %174 = vmatpush.xpose.msra.mxu0 0.0
    %175 = vmatpush.xpose.msra.mxu0 0.0
    %176 = vmatpush.xpose.msra.mxu0 0.0
    %177 = vmatpush.xpose.msra.mxu0 0.0
    %178 = vmatpush.xpose.msra.mxu0 0.0
    %179 = vmatpush.xpose.msra.mxu0 0.0
    %180 = vmatpush.xpose.msra.mxu0 0.0
    %181 = vmatpush.xpose.msra.mxu0 %v164
    %182 = vmatmul.f32.gmra.mxu0 %v161
    %v183 = vpop.f32.mrf.mxu0
    %v184 = vadd.f32 0.0, %v183
    %185 = vdwg.mxu0
    %vm186 = vcmask 64512
    %v187 = vsel %vm186, %v106, -inf
    %188 = vmax.xlane.f32.xlu0 %v187
    %v189 = vpop.xlane.xlu0 %188
    %v190 = vsel %vm186, %v132, -inf
    %191 = vmax.xlane.f32.xlu0 %v190
    %v192 = vpop.xlane.xlu0 %191
    %v193 = vsel %vm186, %v158, -inf
    %194 = vmax.xlane.f32.xlu0 %v193
    %v195 = vpop.xlane.xlu0 %194
    %v196 = vsel %vm186, %v184, -inf
    %197 = vmax.xlane.f32.xlu0 %v196
    %v198 = vpop.xlane.xlu0 %197
    %v199 = vsub.f32 %v106, %v189
    %v200 = vsub.f32 %v132, %v192
    %v201 = vsub.f32 %v158, %v195
    %v202 = vsub.f32 %v184, %v198
    %v203 = vmul.f32 %v199, 1.442695
    %v204 = vpow.pop %v203
    %v205 = vmul.f32 %v200, 1.442695
    %v206 = vpow.pop %v205
    %v207 = vmul.f32 %v201, 1.442695
    %v208 = vpow.pop %v207
    %v209 = vmul.f32 %v202, 1.442695
    %v210 = vpow.pop %v209
    %v211 = vsel %vm186, %v204, 0.0
    %212 = vadd.xlane.f32.xlu0 %v211
    %v213 = vpop.xlane.xlu0 %212
    %v214 = vsel %vm186, %v206, 0.0
    %215 = vadd.xlane.f32.xlu0 %v214
    %v216 = vpop.xlane.xlu0 %215
    %v217 = vsel %vm186, %v208, 0.0
    %218 = vadd.xlane.f32.xlu0 %v217
    %v219 = vpop.xlane.xlu0 %218
    %v220 = vsel %vm186, %v210, 0.0
    %221 = vadd.xlane.f32.xlu0 %v220
    %v222 = vpop.xlane.xlu0 %221
    %v223 = vrcp.pop %v213
    %v224 = vrcp.pop %v216
    %v225 = vrcp.pop %v219
    %v226 = vrcp.pop %v222
    %v227 = vmul.f32 %v204, %v223
    %v228 = vmul.f32 %v206, %v224
    %v229 = vmul.f32 %v208, %v225
    %v230 = vmul.f32 %v210, %v226
    %v232 = vsel %vm186, %v227, 0
    %234 = vmatpush.msra.mxu0 0.0
    %235 = vmatpush.msra.mxu0 0.0
    %236 = vmatpush.msra.mxu0 0.0
    %237 = vmatpush.msra.mxu0 0.0
    %238 = vmatpush.msra.mxu0 0.0
    %239 = vmatpush.msra.mxu0 0.0
    %240 = vmatpush.msra.mxu0 0.0
    %241 = vmatpush.msra.mxu0 0.0
    %242 = vmatpush.msra.mxu0 0.0
    %243 = vmatpush.msra.mxu0 0.0
    %244 = vmatpush.msra.mxu0 0.0
    %245 = vmatpush.msra.mxu0 0.0
    %246 = vmatpush.msra.mxu0 0.0
    %247 = vmatpush.msra.mxu0 0.0
    %248 = vmatpush.msra.mxu0 0.0
    %249 = vmatpush.msra.mxu0 %v77
    %250 = vmatmul.f32.gmra.mxu0 %v232
    %v251 = vpop.f32.mrf.mxu0
    %v252 = vadd.f32 0.0, %v251
    %253 = vdwg.mxu0
    %v255 = vsel %vm186, %v228, 0
    %257 = vmatpush.msra.mxu0 0.0
    %258 = vmatpush.msra.mxu0 0.0
    %259 = vmatpush.msra.mxu0 0.0
    %260 = vmatpush.msra.mxu0 0.0
    %261 = vmatpush.msra.mxu0 0.0
    %262 = vmatpush.msra.mxu0 0.0
    %263 = vmatpush.msra.mxu0 0.0
    %264 = vmatpush.msra.mxu0 0.0
    %265 = vmatpush.msra.mxu0 0.0
    %266 = vmatpush.msra.mxu0 0.0
    %267 = vmatpush.msra.mxu0 0.0
    %268 = vmatpush.msra.mxu0 0.0
    %269 = vmatpush.msra.mxu0 0.0
    %270 = vmatpush.msra.mxu0 0.0
    %271 = vmatpush.msra.mxu0 0.0
    %272 = vmatpush.msra.mxu0 %v78
    %273 = vmatmul.f32.gmra.mxu0 %v255
    %v274 = vpop.f32.mrf.mxu0
    %v275 = vadd.f32 0.0, %v274
    %276 = vdwg.mxu0
    %v278 = vsel %vm186, %v229, 0
    %280 = vmatpush.msra.mxu0 0.0
    %281 = vmatpush.msra.mxu0 0.0
    %282 = vmatpush.msra.mxu0 0.0
    %283 = vmatpush.msra.mxu0 0.0
    %284 = vmatpush.msra.mxu0 0.0
    %285 = vmatpush.msra.mxu0 0.0
    %286 = vmatpush.msra.mxu0 0.0
    %287 = vmatpush.msra.mxu0 0.0
    %288 = vmatpush.msra.mxu0 0.0
    %289 = vmatpush.msra.mxu0 0.0
    %290 = vmatpush.msra.mxu0 0.0
    %291 = vmatpush.msra.mxu0 0.0
    %292 = vmatpush.msra.mxu0 0.0
    %293 = vmatpush.msra.mxu0 0.0
    %294 = vmatpush.msra.mxu0 0.0
    %295 = vmatpush.msra.mxu0 %v79
    %296 = vmatmul.f32.gmra.mxu0 %v278
    %v297 = vpop.f32.mrf.mxu0
    %v298 = vadd.f32 0.0, %v297
    %299 = vdwg.mxu0
    %v301 = vsel %vm186, %v230, 0
    %303 = vmatpush.msra.mxu0 0.0
    %304 = vmatpush.msra.mxu0 0.0
    %305 = vmatpush.msra.mxu0 0.0
    %306 = vmatpush.msra.mxu0 0.0
    %307 = vmatpush.msra.mxu0 0.0
    %308 = vmatpush.msra.mxu0 0.0
    %309 = vmatpush.msra.mxu0 0.0
    %310 = vmatpush.msra.mxu0 0.0
    %311 = vmatpush.msra.mxu0 0.0
    %312 = vmatpush.msra.mxu0 0.0
    %313 = vmatpush.msra.mxu0 0.0
    %314 = vmatpush.msra.mxu0 0.0
    %315 = vmatpush.msra.mxu0 0.0
    %316 = vmatpush.msra.mxu0 0.0
    %317 = vmatpush.msra.mxu0 0.0
    %318 = vmatpush.msra.mxu0 %v80
    %319 = vmatmul.f32.gmra.mxu0 %v301
    %v320 = vpop.f32.mrf.mxu0
    %v321 = vadd.f32 0.0, %v320
    %322 = vdwg.mxu0
    %323 = vst.msk [vmem:[#allocation9] sm:$0xff] %vm186, %v227
    %324 = vst.msk [vmem:[#allocation9 + $0x8] sm:$0xff] %vm186, %v228
    %325 = vst.msk [vmem:[#allocation9 + $0x10] sm:$0xff] %vm186, %v229
    %326 = vst.msk [vmem:[#allocation9 + $0x18] sm:$0xff] %vm186, %v230
    %327 = vst.msk [vmem:[#allocation8] sm:$0xff] %vm81, %v252
    %328 = vst.msk [vmem:[#allocation8 + $0x8] sm:$0xff] %vm81, %v275
    %329 = vst.msk [vmem:[#allocation8 + $0x10] sm:$0xff] %vm81, %v298
    %330 = vst.msk [vmem:[#allocation8 + $0x18] sm:$0xff] %vm81, %v321
    // Predicated region
    $region26: #{tpu_custom_call.1} parent=1 // pred_check
      _
    $region27: #{tpu_custom_call.1} parent=1 // pred_check_branch
      %332 = sbr.rel (0) target = $region29
    $region28: #{tpu_custom_call.1} parent=1 // pred_region
      %334 = vsyncadd [#allocation4], 0
      %s335 = sshll.u32 [#allocation8], 4
      %s336 = int_to_ptr.vmem [resolvable:$true] %s335
      %s337 = sshll.u32 %s3, 4
      %s338 = int_to_ptr.hbm [resolvable:$true] %s337
      %343 = dma.vmem_to_hbm [thread:$0]  %s336, 512, %s338, [#allocation4], 128, 128, 8
    $region29: #{tpu_custom_call.1} parent=1 // pred_fallthru
      _
    // Predicated region
    $region30: #{tpu_custom_call.1} parent=1 // pred_check
      _
    $region31: #{tpu_custom_call.1} parent=1 // pred_check_branch
      %345 = sbr.rel (0) target = $region33
    $region32: #{tpu_custom_call.1} parent=1 // pred_region
      %347 = vsyncadd [#allocation10], 0
      %s348 = sshll.u32 [#allocation9], 4
      %s349 = int_to_ptr.vmem [resolvable:$true] %s348
      %s350 = sshll.u32 %s4, 4
      %s351 = int_to_ptr.hbm [resolvable:$true] %s350
      %356 = dma.vmem_to_hbm [thread:$0]  %s349, 512, %s351, [#allocation10], 128, 128, 8
    $region33: #{tpu_custom_call.1} parent=1 // pred_fallthru
      _
    // Predicated region
    $region34: #{tpu_custom_call.1} parent=1 // pred_check
      _
    $region35: #{tpu_custom_call.1} parent=1 // pred_check_branch
      %358 = sbr.rel (0) target = $region37
    $region36: #{tpu_custom_call.1} parent=1 // pred_region
      %360 = dma.done [#allocation4], 512
    $region37: #{tpu_custom_call.1} parent=1 // pred_fallthru
      _
    // Predicated region
    $region38: #{tpu_custom_call.1} parent=1 // pred_check
      _
    $region39: #{tpu_custom_call.1} parent=1 // pred_check_branch
      %362 = sbr.rel (0) target = $region41
    $region40: #{tpu_custom_call.1} parent=1 // pred_region
      %364 = dma.done [#allocation10], 512
    $region41: #{tpu_custom_call.1} parent=1 // pred_fallthru
      _
    %365 = vsyncpa [#allocation3], 1
    %366 = vsyncpa [#allocation6], 1
    %367 = vsyncpa [#allocation4], 1
    %368 = vsyncpa [#allocation10], 1

// kernel: tpu_custom_call.1
$region0: #{tpu_custom_call.1}
  #allocation0 [shape = 'u32[]', space=smem, size = 0x4, offset = 0x4, fixed_abs, tag = 'smem constant byte address 0x4 - core index']
  #allocation1 [shape = 'u32[72,128]{1,0:T(1,128)}', space=vmem, size = 0x9000, scoped, tag = 'internal scratch']
  %s0 = inlined_call_operand.hbm [shape: f32[4,8,32], index: 0, kind: input, shape index: {}]
  %s1 = inlined_call_operand.hbm [shape: f32[4,8,32], index: 1, kind: input, shape index: {}]
  %s2 = inlined_call_operand.hbm [shape: f32[4,8,32], index: 2, kind: input, shape index: {}]
  %s3 = inlined_call_operand.hbm [shape: f32[4,8,32], index: 3, kind: output, shape index: {0}]
  %s4 = inlined_call_operand.hbm [shape: f32[4,8,8], index: 4, kind: output, shape index: {1}]
  %5 = xla_tuple %s3, %s4
  %s6 = sld [smem:[#allocation0]]
  $region42: #{tpu_custom_call.1} parent=0
    _
  %s8 = ssub.s32 1, %s6
  %s9 = scalar_select 0, %s8, %s6
  $region1: #{tpu_custom_call.1} parent=0
    #allocation2 [shape = 'u8[16384]{0}', space=vmem, size = 0x4000, scoped, tag = 'input window, operand 0, single buffered']
    #allocation3 [shape = 's32[1]{0}', space=sflag, size = 0x4, scoped, tag = 'scoped memory for tpu_custom_call.1']
    #allocation4 [shape = 's32[1]{0}', space=sflag, size = 0x4, scoped, tag = 'scoped memory for tpu_custom_call.1']
    #allocation5 [shape = 'u8[16384]{0}', space=vmem, size = 0x4000, scoped, tag = 'input window, operand 1, single buffered']
    #allocation6 [shape = 's32[1]{0}', space=sflag, size = 0x4, scoped, tag = 'scoped memory for tpu_custom_call.1']
    #allocation7 [shape = 'u8[16384]{0}', space=vmem, size = 0x4000, scoped, tag = 'input window, operand 2, single buffered']
    #allocation8 [shape = 'u8[16384]{0}', space=vmem, size = 0x4000, scoped, tag = 'output window, operand 0, single buffered']
    #allocation9 [shape = 'u8[16384]{0}', space=vmem, size = 0x4000, scoped, tag = 'output window, operand 1, single buffered']
    #allocation10 [shape = 's32[1]{0}', space=sflag, size = 0x4, scoped, tag = 'scoped memory for tpu_custom_call.1']
    %10 = vsyncpa [#allocation3], 0
    %11 = vsyncpa [#allocation6], 0
    %12 = vsyncpa [#allocation4], 0
    %13 = vsyncpa [#allocation10], 0
    // Predicated region
    $region2: #{tpu_custom_call.1} parent=1 // pred_check
      _
    $region3: #{tpu_custom_call.1} parent=1 // pred_check_branch
      %15 = sbr.rel (0) target = $region5
    $region4: #{tpu_custom_call.1} parent=1 // pred_region
      %17 = vsyncadd [#allocation3], 0
      %s18 = sshll.u32 %s0, 4
      %s19 = int_to_ptr.hbm [resolvable:$true] %s18
      %s20 = sshll.u32 [#allocation2], 4
      %s21 = int_to_ptr.vmem [resolvable:$true] %s20
      %26 = dma.hbm_to_vmem [thread:$0]  %s19, 512, %s21, [#allocation3], 128, 128, 8
    $region5: #{tpu_custom_call.1} parent=1 // pred_fallthru
      _
    // Predicated region
    $region6: #{tpu_custom_call.1} parent=1 // pred_check
      _
    $region7: #{tpu_custom_call.1} parent=1 // pred_check_branch
      %28 = sbr.rel (0) target = $region9
    $region8: #{tpu_custom_call.1} parent=1 // pred_region
      %30 = vsyncadd [#allocation6], 0
      %s31 = sshll.u32 %s1, 4
      %s32 = int_to_ptr.hbm [resolvable:$true] %s31
      %s33 = sshll.u32 [#allocation5], 4
      %s34 = int_to_ptr.vmem [resolvable:$true] %s33
      %39 = dma.hbm_to_vmem [thread:$0]  %s32, 512, %s34, [#allocation6], 128, 128, 8
    $region9: #{tpu_custom_call.1} parent=1 // pred_fallthru
      _
    // Predicated region
    $region10: #{tpu_custom_call.1} parent=1 // pred_check
      _
    $region11: #{tpu_custom_call.1} parent=1 // pred_check_branch
      %41 = sbr.rel (0) target = $region13
    $region12: #{tpu_custom_call.1} parent=1 // pred_region
      %43 = vsyncadd [#allocation6], 0
      %s44 = sshll.u32 %s2, 4
      %s45 = int_to_ptr.hbm [resolvable:$true] %s44
      %s46 = sshll.u32 [#allocation7], 4
      %s47 = int_to_ptr.vmem [resolvable:$true] %s46
      %52 = dma.hbm_to_vmem [thread:$0]  %s45, 512, %s47, [#allocation6], 128, 128, 8
    $region13: #{tpu_custom_call.1} parent=1 // pred_fallthru
      _
    // Predicated region
    $region14: #{tpu_custom_call.1} parent=1 // pred_check
      _
    $region15: #{tpu_custom_call.1} parent=1 // pred_check_branch
      %54 = sbr.rel (0) target = $region17
    $region16: #{tpu_custom_call.1} parent=1 // pred_region
      %56 = dma.done [#allocation3], 512
    $region17: #{tpu_custom_call.1} parent=1 // pred_fallthru
      _
    // Predicated region
    $region18: #{tpu_custom_call.1} parent=1 // pred_check
      _
    $region19: #{tpu_custom_call.1} parent=1 // pred_check_branch
      %58 = sbr.rel (0) target = $region21
    $region20: #{tpu_custom_call.1} parent=1 // pred_region
      %60 = dma.done [#allocation6], 512
    $region21: #{tpu_custom_call.1} parent=1 // pred_fallthru
      _
    // Predicated region
    $region22: #{tpu_custom_call.1} parent=1 // pred_check
      _
    $region23: #{tpu_custom_call.1} parent=1 // pred_check_branch
      %62 = sbr.rel (0) target = $region25
    $region24: #{tpu_custom_call.1} parent=1 // pred_region
      %64 = dma.done [#allocation6], 512
    $region25: #{tpu_custom_call.1} parent=1 // pred_fallthru
      _
    %v65 = vld [vmem:[#allocation2] sm:$0xff]
    %v66 = vld [vmem:[#allocation2 + $0x8] sm:$0xff]
    %v67 = vld [vmem:[#allocation2 + $0x10] sm:$0xff]
    %v68 = vld [vmem:[#allocation2 + $0x18] sm:$0xff]
    %v69 = vmul.f32 %v65, 0.17677669
    %v70 = vmul.f32 %v66, 0.17677669
    %v71 = vmul.f32 %v67, 0.17677669
    %v72 = vmul.f32 %v68, 0.17677669
    %v73 = vld [vmem:[#allocation5] sm:$0xff]
    %v74 = vld [vmem:[#allocation5 + $0x8] sm:$0xff]
    %v75 = vld [vmem:[#allocation5 + $0x10] sm:$0xff]
    %v76 = vld [vmem:[#allocation5 + $0x18] sm:$0xff]
    %v77 = vld [vmem:[#allocation7] sm:$0xff]
    %v78 = vld [vmem:[#allocation7 + $0x8] sm:$0xff]
    %v79 = vld [vmem:[#allocation7 + $0x10] sm:$0xff]
    %v80 = vld [vmem:[#allocation7 + $0x18] sm:$0xff]
    %vm81 = vcmask 261120
    %v83 = vsel %vm81, %v69, 0
    %v86 = vsel %vm81, %v73, 0
    %88 = vmatpush.xpose.msra.mxu0 0.0
    %89 = vmatpush.xpose.msra.mxu0 0.0
    %90 = vmatpush.xpose.msra.mxu0 0.0
    %91 = vmatpush.xpose.msra.mxu0 0.0
    %92 = vmatpush.xpose.msra.mxu0 0.0
    %93 = vmatpush.xpose.msra.mxu0 0.0
    %94 = vmatpush.xpose.msra.mxu0 0.0
    %95 = vmatpush.xpose.msra.mxu0 0.0
    %96 = vmatpush.xpose.msra.mxu0 0.0
    %97 = vmatpush.xpose.msra.mxu0 0.0
    %98 = vmatpush.xpose.msra.mxu0 0.0
    %99 = vmatpush.xpose.msra.mxu0 0.0
    %100 = vmatpush.xpose.msra.mxu0 0.0
    %101 = vmatpush.xpose.msra.mxu0 0.0
    %102 = vmatpush.xpose.msra.mxu0 0.0
    %103 = vmatpush.xpose.msra.mxu0 %v86
    %104 = vmatmul.f32.gmra.mxu0 %v83
    %v105 = vpop.f32.mrf.mxu0
    %v106 = vadd.f32 0.0, %v105
    %107 = vdwg.mxu0
    %v109 = vsel %vm81, %v70, 0
    %v112 = vsel %vm81, %v74, 0
    %114 = vmatpush.xpose.msra.mxu0 0.0
    %115 = vmatpush.xpose.msra.mxu0 0.0
    %116 = vmatpush.xpose.msra.mxu0 0.0
    %117 = vmatpush.xpose.msra.mxu0 0.0
    %118 = vmatpush.xpose.msra.mxu0 0.0
    %119 = vmatpush.xpose.msra.mxu0 0.0
    %120 = vmatpush.xpose.msra.mxu0 0.0
    %121 = vmatpush.xpose.msra.mxu0 0.0
    %122 = vmatpush.xpose.msra.mxu0 0.0
    %123 = vmatpush.xpose.msra.mxu0 0.0
    %124 = vmatpush.xpose.msra.mxu0 0.0
    %125 = vmatpush.xpose.msra.mxu0 0.0
    %126 = vmatpush.xpose.msra.mxu0 0.0
    %127 = vmatpush.xpose.msra.mxu0 0.0
    %128 = vmatpush.xpose.msra.mxu0 0.0
    %129 = vmatpush.xpose.msra.mxu0 %v112
    %130 = vmatmul.f32.gmra.mxu0 %v109
    %v131 = vpop.f32.mrf.mxu0
    %v132 = vadd.f32 0.0, %v131
    %133 = vdwg.mxu0
    %v135 = vsel %vm81, %v71, 0
    %v138 = vsel %vm81, %v75, 0
    %140 = vmatpush.xpose.msra.mxu0 0.0
    %141 = vmatpush.xpose.msra.mxu0 0.0
    %142 = vmatpush.xpose.msra.mxu0 0.0
    %143 = vmatpush.xpose.msra.mxu0 0.0
    %144 = vmatpush.xpose.msra.mxu0 0.0
    %145 = vmatpush.xpose.msra.mxu0 0.0
    %146 = vmatpush.xpose.msra.mxu0 0.0
    %147 = vmatpush.xpose.msra.mxu0 0.0
    %148 = vmatpush.xpose.msra.mxu0 0.0
    %149 = vmatpush.xpose.msra.mxu0 0.0
    %150 = vmatpush.xpose.msra.mxu0 0.0
    %151 = vmatpush.xpose.msra.mxu0 0.0
    %152 = vmatpush.xpose.msra.mxu0 0.0
    %153 = vmatpush.xpose.msra.mxu0 0.0
    %154 = vmatpush.xpose.msra.mxu0 0.0
    %155 = vmatpush.xpose.msra.mxu0 %v138
    %156 = vmatmul.f32.gmra.mxu0 %v135
    %v157 = vpop.f32.mrf.mxu0
    %v158 = vadd.f32 0.0, %v157
    %159 = vdwg.mxu0
    %v161 = vsel %vm81, %v72, 0
    %v164 = vsel %vm81, %v76, 0
    %166 = vmatpush.xpose.msra.mxu0 0.0
    %167 = vmatpush.xpose.msra.mxu0 0.0
    %168 = vmatpush.xpose.msra.mxu0 0.0
    %169 = vmatpush.xpose.msra.mxu0 0.0
    %170 = vmatpush.xpose.msra.mxu0 0.0
    %171 = vmatpush.xpose.msra.mxu0 0.0
    %172 = vmatpush.xpose.msra.mxu0 0.0
    %173 = vmatpush.xpose.msra.mxu0 0.0
    %174 = vmatpush.xpose.msra.mxu0 0.0
    %175 = vmatpush.xpose.msra.mxu0 0.0
    %176 = vmatpush.xpose.msra.mxu0 0.0
    %177 = vmatpush.xpose.msra.mxu0 0.0
    %178 = vmatpush.xpose.msra.mxu0 0.0
    %179 = vmatpush.xpose.msra.mxu0 0.0
    %180 = vmatpush.xpose.msra.mxu0 0.0
    %181 = vmatpush.xpose.msra.mxu0 %v164
    %182 = vmatmul.f32.gmra.mxu0 %v161
    %v183 = vpop.f32.mrf.mxu0
    %v184 = vadd.f32 0.0, %v183
    %185 = vdwg.mxu0
    %vm186 = vcmask 64512
    %v187 = vsel %vm186, %v106, -inf
    %188 = vmax.xlane.f32.xlu0 %v187
    %v189 = vpop.xlane.xlu0 %188
    %v190 = vsel %vm186, %v132, -inf
    %191 = vmax.xlane.f32.xlu0 %v190
    %v192 = vpop.xlane.xlu0 %191
    %v193 = vsel %vm186, %v158, -inf
    %194 = vmax.xlane.f32.xlu0 %v193
    %v195 = vpop.xlane.xlu0 %194
    %v196 = vsel %vm186, %v184, -inf
    %197 = vmax.xlane.f32.xlu0 %v196
    %v198 = vpop.xlane.xlu0 %197
    %v199 = vsub.f32 %v106, %v189
    %v200 = vsub.f32 %v132, %v192
    %v201 = vsub.f32 %v158, %v195
    %v202 = vsub.f32 %v184, %v198
    %v203 = vmul.f32 %v199, 1.442695
    %v204 = vpow.pop %v203
    %v205 = vmul.f32 %v200, 1.442695
    %v206 = vpow.pop %v205
    %v207 = vmul.f32 %v201, 1.442695
    %v208 = vpow.pop %v207
    %v209 = vmul.f32 %v202, 1.442695
    %v210 = vpow.pop %v209
    %v211 = vsel %vm186, %v204, 0.0
    %212 = vadd.xlane.f32.xlu0 %v211
    %v213 = vpop.xlane.xlu0 %212
    %v214 = vsel %vm186, %v206, 0.0
    %215 = vadd.xlane.f32.xlu0 %v214
    %v216 = vpop.xlane.xlu0 %215
    %v217 = vsel %vm186, %v208, 0.0
    %218 = vadd.xlane.f32.xlu0 %v217
    %v219 = vpop.xlane.xlu0 %218
    %v220 = vsel %vm186, %v210, 0.0
    %221 = vadd.xlane.f32.xlu0 %v220
    %v222 = vpop.xlane.xlu0 %221
    %v223 = vrcp.pop %v213
    %v224 = vrcp.pop %v216
    %v225 = vrcp.pop %v219
    %v226 = vrcp.pop %v222
    %v227 = vmul.f32 %v204, %v223
    %v228 = vmul.f32 %v206, %v224
    %v229 = vmul.f32 %v208, %v225
    %v230 = vmul.f32 %v210, %v226
    %v232 = vsel %vm186, %v227, 0
    %234 = vmatpush.msra.mxu0 0.0
    %235 = vmatpush.msra.mxu0 0.0
    %236 = vmatpush.msra.mxu0 0.0
    %237 = vmatpush.msra.mxu0 0.0
    %238 = vmatpush.msra.mxu0 0.0
    %239 = vmatpush.msra.mxu0 0.0
    %240 = vmatpush.msra.mxu0 0.0
    %241 = vmatpush.msra.mxu0 0.0
    %242 = vmatpush.msra.mxu0 0.0
    %243 = vmatpush.msra.mxu0 0.0
    %244 = vmatpush.msra.mxu0 0.0
    %245 = vmatpush.msra.mxu0 0.0
    %246 = vmatpush.msra.mxu0 0.0
    %247 = vmatpush.msra.mxu0 0.0
    %248 = vmatpush.msra.mxu0 0.0
    %249 = vmatpush.msra.mxu0 %v77
    %250 = vmatmul.f32.gmra.mxu0 %v232
    %v251 = vpop.f32.mrf.mxu0
    %v252 = vadd.f32 0.0, %v251
    %253 = vdwg.mxu0
    %v255 = vsel %vm186, %v228, 0
    %257 = vmatpush.msra.mxu0 0.0
    %258 = vmatpush.msra.mxu0 0.0
    %259 = vmatpush.msra.mxu0 0.0
    %260 = vmatpush.msra.mxu0 0.0
    %261 = vmatpush.msra.mxu0 0.0
    %262 = vmatpush.msra.mxu0 0.0
    %263 = vmatpush.msra.mxu0 0.0
    %264 = vmatpush.msra.mxu0 0.0
    %265 = vmatpush.msra.mxu0 0.0
    %266 = vmatpush.msra.mxu0 0.0
    %267 = vmatpush.msra.mxu0 0.0
    %268 = vmatpush.msra.mxu0 0.0
    %269 = vmatpush.msra.mxu0 0.0
    %270 = vmatpush.msra.mxu0 0.0
    %271 = vmatpush.msra.mxu0 0.0
    %272 = vmatpush.msra.mxu0 %v78
    %273 = vmatmul.f32.gmra.mxu0 %v255
    %v274 = vpop.f32.mrf.mxu0
    %v275 = vadd.f32 0.0, %v274
    %276 = vdwg.mxu0
    %v278 = vsel %vm186, %v229, 0
    %280 = vmatpush.msra.mxu0 0.0
    %281 = vmatpush.msra.mxu0 0.0
    %282 = vmatpush.msra.mxu0 0.0
    %283 = vmatpush.msra.mxu0 0.0
    %284 = vmatpush.msra.mxu0 0.0
    %285 = vmatpush.msra.mxu0 0.0
    %286 = vmatpush.msra.mxu0 0.0
    %287 = vmatpush.msra.mxu0 0.0
    %288 = vmatpush.msra.mxu0 0.0
    %289 = vmatpush.msra.mxu0 0.0
    %290 = vmatpush.msra.mxu0 0.0
    %291 = vmatpush.msra.mxu0 0.0
    %292 = vmatpush.msra.mxu0 0.0
    %293 = vmatpush.msra.mxu0 0.0
    %294 = vmatpush.msra.mxu0 0.0
    %295 = vmatpush.msra.mxu0 %v79
    %296 = vmatmul.f32.gmra.mxu0 %v278
    %v297 = vpop.f32.mrf.mxu0
    %v298 = vadd.f32 0.0, %v297
    %299 = vdwg.mxu0
    %v301 = vsel %vm186, %v230, 0
    %303 = vmatpush.msra.mxu0 0.0
    %304 = vmatpush.msra.mxu0 0.0
    %305 = vmatpush.msra.mxu0 0.0
    %306 = vmatpush.msra.mxu0 0.0
    %307 = vmatpush.msra.mxu0 0.0
    %308 = vmatpush.msra.mxu0 0.0
    %309 = vmatpush.msra.mxu0 0.0
    %310 = vmatpush.msra.mxu0 0.0
    %311 = vmatpush.msra.mxu0 0.0
    %312 = vmatpush.msra.mxu0 0.0
    %313 = vmatpush.msra.mxu0 0.0
    %314 = vmatpush.msra.mxu0 0.0
    %315 = vmatpush.msra.mxu0 0.0
    %316 = vmatpush.msra.mxu0 0.0
    %317 = vmatpush.msra.mxu0 0.0
    %318 = vmatpush.msra.mxu0 %v80
    %319 = vmatmul.f32.gmra.mxu0 %v301
    %v320 = vpop.f32.mrf.mxu0
    %v321 = vadd.f32 0.0, %v320
    %322 = vdwg.mxu0
    %323 = vst.msk [vmem:[#allocation9] sm:$0xff] %vm186, %v227
    %324 = vst.msk [vmem:[#allocation9 + $0x8] sm:$0xff] %vm186, %v228
    %325 = vst.msk [vmem:[#allocation9 + $0x10] sm:$0xff] %vm186, %v229
    %326 = vst.msk [vmem:[#allocation9 + $0x18] sm:$0xff] %vm186, %v230
    %327 = vst.msk [vmem:[#allocation8] sm:$0xff] %vm81, %v252
    %328 = vst.msk [vmem:[#allocation8 + $0x8] sm:$0xff] %vm81, %v275
    %329 = vst.msk [vmem:[#allocation8 + $0x10] sm:$0xff] %vm81, %v298
    %330 = vst.msk [vmem:[#allocation8 + $0x18] sm:$0xff] %vm81, %v321
    // Predicated region
    $region26: #{tpu_custom_call.1} parent=1 // pred_check
      _
    $region27: #{tpu_custom_call.1} parent=1 // pred_check_branch
      %332 = sbr.rel (0) target = $region29
    $region28: #{tpu_custom_call.1} parent=1 // pred_region
      %334 = vsyncadd [#allocation4], 0
      %s335 = sshll.u32 [#allocation8], 4
      %s336 = int_to_ptr.vmem [resolvable:$true] %s335
      %s337 = sshll.u32 %s3, 4
      %s338 = int_to_ptr.hbm [resolvable:$true] %s337
      %343 = dma.vmem_to_hbm [thread:$0]  %s336, 512, %s338, [#allocation4], 128, 128, 8
    $region29: #{tpu_custom_call.1} parent=1 // pred_fallthru
      _
    // Predicated region
    $region30: #{tpu_custom_call.1} parent=1 // pred_check
      _
    $region31: #{tpu_custom_call.1} parent=1 // pred_check_branch
      %345 = sbr.rel (0) target = $region33
    $region32: #{tpu_custom_call.1} parent=1 // pred_region
      %347 = vsyncadd [#allocation10], 0
      %s348 = sshll.u32 [#allocation9], 4
      %s349 = int_to_ptr.vmem [resolvable:$true] %s348
      %s350 = sshll.u32 %s4, 4
      %s351 = int_to_ptr.hbm [resolvable:$true] %s350
      %356 = dma.vmem_to_hbm [thread:$0]  %s349, 512, %s351, [#allocation10], 128, 128, 8
    $region33: #{tpu_custom_call.1} parent=1 // pred_fallthru
      _
    // Predicated region
    $region34: #{tpu_custom_call.1} parent=1 // pred_check
      _
    $region35: #{tpu_custom_call.1} parent=1 // pred_check_branch
      %358 = sbr.rel (0) target = $region37
    $region36: #{tpu_custom_call.1} parent=1 // pred_region
      %360 = dma.done [#allocation4], 512
    $region37: #{tpu_custom_call.1} parent=1 // pred_fallthru
      _
    // Predicated region
    $region38: #{tpu_custom_call.1} parent=1 // pred_check
      _
    $region39: #{tpu_custom_call.1} parent=1 // pred_check_branch
      %362 = sbr.rel (0) target = $region41
    $region40: #{tpu_custom_call.1} parent=1 // pred_region
      %364 = dma.done [#allocation10], 512
    $region41: #{tpu_custom_call.1} parent=1 // pred_fallthru
      _
    %365 = vsyncpa [#allocation3], 1
    %366 = vsyncpa [#allocation6], 1
    %367 = vsyncpa [#allocation4], 1
    %368 = vsyncpa [#allocation10], 1

</llo_original>
